<compile_context>
chip_gen: v6e
topology: v6e:2x2x1
jax: 0.10.0
libtpu: 0.0.40
codegen_flags: <defaults>
</compile_context>

<pallas_src>
import jax
import jax.numpy as jnp
from jax.experimental import pallas as pl
from jax.experimental.pallas import tpu as pltpu


def _round_up(n: int, m: int) -> int:
    return ((n + m - 1) // m) * m


def _make_encoder_kernel(compute_dtype):
    def kernel(x_ref, w1_ref, b1_ref, w2_ref, b2_ref, w3_ref, b3_ref,
               h2_ref, h1_ref):
        x = x_ref[...].astype(compute_dtype)

        # fc1 + ReLU  (MXU matmul, f32 accumulate; bias + ReLU on VPU in f32)
        h = jnp.dot(x, w1_ref[...].astype(compute_dtype),
                    preferred_element_type=jnp.float32)
        h = jnp.maximum(h + b1_ref[...], 0.0)

        # fc2 + ReLU
        h1 = jnp.dot(h.astype(compute_dtype), w2_ref[...].astype(compute_dtype),
                     preferred_element_type=jnp.float32)
        h1 = jnp.maximum(h1 + b2_ref[...], 0.0)

        # fc3 (no activation) -> single lane-dense output; chunk done in wrapper
        h2 = jnp.dot(h1.astype(compute_dtype), w3_ref[...].astype(compute_dtype),
                     preferred_element_type=jnp.float32)
        h2 = h2 + b3_ref[...]

        h2_ref[...] = h2.astype(h2_ref.dtype)
        h1_ref[...] = h1.astype(h1_ref.dtype)

    return kernel


def gaussian_encoder_forward(x, params, *, tile_b=256, compute_dtype=jnp.float32):
    """GaussianEncoder forward in one Pallas kernel (batch-tiled).

    x: [B, input_dim] float32
    params: dict with w1 [input_dim, hidden], b1 [1, hidden],
            w2 [hidden, hidden],   b2 [1, hidden],
            w3 [hidden, 2*z_dim],  b3 [1, 2*z_dim]
    returns (mu [B, z_dim], logvar [B, z_dim], h1 [B, hidden])
    """
    B, input_dim = x.shape
    hidden_dim = params["w1"].shape[1]
    two_z = params["w3"].shape[1]
    z_dim = two_z // 2

    # Batch tile: a multiple of 8 (f32 sublane), at most `tile_b` (default 256).
    tile_b = max(8, min(_round_up(tile_b, 8), _round_up(B, 8)))
    b_pad = _round_up(B, tile_b)
    if b_pad != B:
        x = jnp.pad(x, ((0, b_pad - B), (0, 0)))
    grid = (b_pad // tile_b,)

    kernel = _make_encoder_kernel(compute_dtype)

    # x / outputs tiled over the batch grid; weights & biases use a constant
    # index_map so they are fetched once and stay resident in VMEM.
    x_spec = pl.BlockSpec((tile_b, input_dim), lambda i: (i, 0))

    def resident(arr):
        return pl.BlockSpec(arr.shape, lambda i: (0, 0))

    in_specs = [
        x_spec,
        resident(params["w1"]), resident(params["b1"]),
        resident(params["w2"]), resident(params["b2"]),
        resident(params["w3"]), resident(params["b3"]),
    ]
    out_specs = (
        pl.BlockSpec((tile_b, two_z), lambda i: (i, 0)),       # h2 (lane-dense)
        pl.BlockSpec((tile_b, hidden_dim), lambda i: (i, 0)),  # h1
    )
    out_shapes = (
        jax.ShapeDtypeStruct((b_pad, two_z), jnp.float32),
        jax.ShapeDtypeStruct((b_pad, hidden_dim), jnp.float32),
    )

    # Cost estimate for XLA's scheduler.
    flops = 2 * b_pad * (input_dim * hidden_dim
                         + hidden_dim * hidden_dim
                         + hidden_dim * two_z)
    weight_bytes = 4 * (params["w1"].size + params["b1"].size
                        + params["w2"].size + params["b2"].size
                        + params["w3"].size + params["b3"].size)
    bytes_accessed = 4 * (x.size + b_pad * (two_z + hidden_dim)) + weight_bytes

    # VMEM budget: double-buffered x / h1 / h2 tiles + resident weights +
    # intermediate tiles, with headroom. Clamped so it is always valid on
    # v7x's 64 MiB physical VMEM (and below v5e/v6e's 128 MiB).
    vmem_needed = (
        2 * 4 * tile_b * input_dim                  # x tile, double-buffered
        + 2 * 4 * tile_b * (hidden_dim + two_z)     # h1/h2 out tiles, double-buffered
        + 2 * weight_bytes                          # weights/biases (conservative 2x)
        + 3 * 4 * tile_b * hidden_dim               # in-kernel temporaries
    )
    vmem_limit = int(min(56 * 1024 * 1024,
                         max(16 * 1024 * 1024, int(vmem_needed * 1.5))))

    h2_full, h1_full = pl.pallas_call(
        kernel,
        grid=grid,
        in_specs=in_specs,
        out_specs=out_specs,
        out_shape=out_shapes,
        compiler_params=pltpu.CompilerParams(
            # Independent batch axis -> sharded across both TCs on v7x
            # (no-op on single-core v5e/v6e).
            dimension_semantics=("parallel",),
            vmem_limit_bytes=vmem_limit,
        ),
        cost_estimate=pl.CostEstimate(
            flops=flops, transcendentals=0, bytes_accessed=bytes_accessed),
    )(x, params["w1"], params["b1"], params["w2"], params["b2"],
      params["w3"], params["b3"])

    # torch.chunk(h2, 2, dim=1) -> (mu, logvar): zero-cost slices in the wrapper.
    mu = h2_full[:B, :z_dim]
    logvar = h2_full[:B, z_dim:]
    h1 = h1_full[:B]
    return mu, logvar, h1


def init_params(key, input_dim, z_dim, hidden_dim):
    """Deterministic synthetic parameter init (shapes match nn.Linear)."""
    ks = jax.random.split(key, 6)

    def u(k, shape, fan_in):
        bound = 1.0 / jnp.sqrt(fan_in)
        return jax.random.uniform(k, shape, jnp.float32, -bound, bound)

    return {
        # stored pre-transposed: [in_features, out_features]
        "w1": u(ks[0], (input_dim, hidden_dim), input_dim),
        "b1": u(ks[1], (1, hidden_dim), input_dim),
        "w2": u(ks[2], (hidden_dim, hidden_dim), hidden_dim),
        "b2": u(ks[3], (1, hidden_dim), hidden_dim),
        "w3": u(ks[4], (hidden_dim, 2 * z_dim), hidden_dim),
        "b3": u(ks[5], (1, 2 * z_dim), hidden_dim),
    }


def reference_forward(x, p):
    h = jnp.maximum(x @ p["w1"] + p["b1"], 0.0)
    h1 = jnp.maximum(h @ p["w2"] + p["b2"], 0.0)
    h2 = h1 @ p["w3"] + p["b3"]
    z = p["w3"].shape[1] // 2
    return h2[:, :z], h2[:, z:], h1


if __name__ == "__main__":
    B, input_dim, z_dim, hidden_dim = 2, 16, 8, 32

    key = jax.random.PRNGKey(0)
    k_x, k_p = jax.random.split(key)
    x = jax.random.normal(k_x, (B, input_dim), jnp.float32)
    params = init_params(k_p, input_dim, z_dim, hidden_dim)

    mu, logvar, h1 = gaussian_encoder_forward(x, params)
    jax.block_until_ready((mu, logvar, h1))

    mu_r, logvar_r, h1_r = reference_forward(x, params)
    assert mu.shape == (B, z_dim) and logvar.shape == (B, z_dim)
    assert h1.shape == (B, hidden_dim)
    assert jnp.allclose(mu, mu_r, atol=1e-5)
    assert jnp.allclose(logvar, logvar_r, atol=1e-5)
    assert jnp.allclose(h1, h1_r, atol=1e-5)

    print("KERNEL_OK")
</pallas_src>

<mosaic_0001>
module attributes {stable_mosaic.version = 11 : i64} {
  func.func @kernel(%arg0: i32, %arg1: memref<8x16xf32, #tpu.memory_space<vmem>>, %arg2: memref<16x32xf32, #tpu.memory_space<vmem>>, %arg3: memref<1x32xf32, #tpu.memory_space<vmem>>, %arg4: memref<32x32xf32, #tpu.memory_space<vmem>>, %arg5: memref<1x32xf32, #tpu.memory_space<vmem>>, %arg6: memref<32x16xf32, #tpu.memory_space<vmem>>, %arg7: memref<1x16xf32, #tpu.memory_space<vmem>>, %arg8: memref<8x16xf32, #tpu.memory_space<vmem>>, %arg9: memref<8x32xf32, #tpu.memory_space<vmem>>) attributes {dimension_semantics = [#tpu.dimension_semantics<parallel>], iteration_bounds = array<i64: 1>, scalar_prefetch = 0 : i64, scratch_operands = 0 : i64, tpu.core_type = #tpu.core_type<tc>, window_params = [{transform_indices = @transform_0, window_bounds = array<i64: 8, 16>}, {pipeline_mode = #tpu.pipeline_mode<synchronous>, transform_indices = @transform_1, window_bounds = array<i64: 16, 32>}, {pipeline_mode = #tpu.pipeline_mode<synchronous>, transform_indices = @transform_2, window_bounds = array<i64: 1, 32>}, {pipeline_mode = #tpu.pipeline_mode<synchronous>, transform_indices = @transform_3, window_bounds = array<i64: 32, 32>}, {pipeline_mode = #tpu.pipeline_mode<synchronous>, transform_indices = @transform_4, window_bounds = array<i64: 1, 32>}, {pipeline_mode = #tpu.pipeline_mode<synchronous>, transform_indices = @transform_5, window_bounds = array<i64: 32, 16>}, {pipeline_mode = #tpu.pipeline_mode<synchronous>, transform_indices = @transform_6, window_bounds = array<i64: 1, 16>}, {transform_indices = @transform_7, window_bounds = array<i64: 8, 16>}, {transform_indices = @transform_8, window_bounds = array<i64: 8, 32>}]} {
    %c0 = arith.constant 0 : index
    %c0_0 = arith.constant 0 : index
    %0 = vector.load %arg1[%c0, %c0_0] : memref<8x16xf32, #tpu.memory_space<vmem>>, vector<8x16xf32>
    %c0_1 = arith.constant 0 : index
    %c0_2 = arith.constant 0 : index
    %1 = vector.load %arg2[%c0_1, %c0_2] : memref<16x32xf32, #tpu.memory_space<vmem>>, vector<16x32xf32>
    %cst = arith.constant dense<0.000000e+00> : vector<8x32xf32>
    %2 = tpu.matmul %0, %1, %cst {dimension_numbers = #tpu.dot_dimension_numbers<[1], [0], [0], [1], [0, 0, 1, 1], [], []>} : vector<8x16xf32>, vector<16x32xf32>, vector<8x32xf32> -> vector<8x32xf32>
    %c0_3 = arith.constant 0 : index
    %c0_4 = arith.constant 0 : index
    %3 = vector.load %arg3[%c0_3, %c0_4] : memref<1x32xf32, #tpu.memory_space<vmem>>, vector<1x32xf32>
    %4 = vector.broadcast %3 : vector<1x32xf32> to vector<8x32xf32>
    %5 = arith.addf %2, %4 : vector<8x32xf32>
    %cst_5 = arith.constant 0.000000e+00 : f32
    %6 = vector.broadcast %cst_5 : f32 to vector<8x32xf32>
    %7 = arith.maximumf %5, %6 : vector<8x32xf32>
    %c0_6 = arith.constant 0 : index
    %c0_7 = arith.constant 0 : index
    %8 = vector.load %arg4[%c0_6, %c0_7] : memref<32x32xf32, #tpu.memory_space<vmem>>, vector<32x32xf32>
    %cst_8 = arith.constant dense<0.000000e+00> : vector<8x32xf32>
    %9 = tpu.matmul %7, %8, %cst_8 {dimension_numbers = #tpu.dot_dimension_numbers<[1], [0], [0], [1], [0, 0, 1, 1], [], []>} : vector<8x32xf32>, vector<32x32xf32>, vector<8x32xf32> -> vector<8x32xf32>
    %c0_9 = arith.constant 0 : index
    %c0_10 = arith.constant 0 : index
    %10 = vector.load %arg5[%c0_9, %c0_10] : memref<1x32xf32, #tpu.memory_space<vmem>>, vector<1x32xf32>
    %11 = vector.broadcast %10 : vector<1x32xf32> to vector<8x32xf32>
    %12 = arith.addf %9, %11 : vector<8x32xf32>
    %cst_11 = arith.constant 0.000000e+00 : f32
    %13 = vector.broadcast %cst_11 : f32 to vector<8x32xf32>
    %14 = arith.maximumf %12, %13 : vector<8x32xf32>
    %c0_12 = arith.constant 0 : index
    %c0_13 = arith.constant 0 : index
    %15 = vector.load %arg6[%c0_12, %c0_13] : memref<32x16xf32, #tpu.memory_space<vmem>>, vector<32x16xf32>
    %cst_14 = arith.constant dense<0.000000e+00> : vector<8x16xf32>
    %16 = tpu.matmul %14, %15, %cst_14 {dimension_numbers = #tpu.dot_dimension_numbers<[1], [0], [0], [1], [0, 0, 1, 1], [], []>} : vector<8x32xf32>, vector<32x16xf32>, vector<8x16xf32> -> vector<8x16xf32>
    %c0_15 = arith.constant 0 : index
    %c0_16 = arith.constant 0 : index
    %17 = vector.load %arg7[%c0_15, %c0_16] : memref<1x16xf32, #tpu.memory_space<vmem>>, vector<1x16xf32>
    %18 = vector.broadcast %17 : vector<1x16xf32> to vector<8x16xf32>
    %19 = arith.addf %16, %18 : vector<8x16xf32>
    %c0_17 = arith.constant 0 : index
    %c0_18 = arith.constant 0 : index
    %20 = vector.load %arg8[%c0_17, %c0_18] : memref<8x16xf32, #tpu.memory_space<vmem>>, vector<8x16xf32>
    tpu.vector_store %arg8[%c0_17, %c0_18], %19 {strides = array<i32>} : memref<8x16xf32, #tpu.memory_space<vmem>>, vector<8x16xf32>,
    %c0_19 = arith.constant 0 : index
    %c0_20 = arith.constant 0 : index
    %21 = vector.load %arg9[%c0_19, %c0_20] : memref<8x32xf32, #tpu.memory_space<vmem>>, vector<8x32xf32>
    tpu.vector_store %arg9[%c0_19, %c0_20], %14 {strides = array<i32>} : memref<8x32xf32, #tpu.memory_space<vmem>>, vector<8x32xf32>,
    return
  }
  func.func @transform_0(%arg0: i32) -> (i32, i32) {
    %c0_i32 = arith.constant 0 : i32
    %c0_i32_0 = arith.constant 0 : i32
    return %arg0, %c0_i32 : i32, i32
  }
  func.func @transform_1(%arg0: i32) -> (i32, i32) {
    %c0_i32 = arith.constant 0 : i32
    %c0_i32_0 = arith.constant 0 : i32
    %c0_i32_1 = arith.constant 0 : i32
    return %c0_i32, %c0_i32_0 : i32, i32
  }
  func.func @transform_2(%arg0: i32) -> (i32, i32) {
    %c0_i32 = arith.constant 0 : i32
    %c0_i32_0 = arith.constant 0 : i32
    %c0_i32_1 = arith.constant 0 : i32
    return %c0_i32, %c0_i32_0 : i32, i32
  }
  func.func @transform_3(%arg0: i32) -> (i32, i32) {
    %c0_i32 = arith.constant 0 : i32
    %c0_i32_0 = arith.constant 0 : i32
    %c0_i32_1 = arith.constant 0 : i32
    return %c0_i32, %c0_i32_0 : i32, i32
  }
  func.func @transform_4(%arg0: i32) -> (i32, i32) {
    %c0_i32 = arith.constant 0 : i32
    %c0_i32_0 = arith.constant 0 : i32
    %c0_i32_1 = arith.constant 0 : i32
    return %c0_i32, %c0_i32_0 : i32, i32
  }
  func.func @transform_5(%arg0: i32) -> (i32, i32) {
    %c0_i32 = arith.constant 0 : i32
    %c0_i32_0 = arith.constant 0 : i32
    %c0_i32_1 = arith.constant 0 : i32
    return %c0_i32, %c0_i32_0 : i32, i32
  }
  func.func @transform_6(%arg0: i32) -> (i32, i32) {
    %c0_i32 = arith.constant 0 : i32
    %c0_i32_0 = arith.constant 0 : i32
    %c0_i32_1 = arith.constant 0 : i32
    return %c0_i32, %c0_i32_0 : i32, i32
  }
  func.func @transform_7(%arg0: i32) -> (i32, i32) {
    %c0_i32 = arith.constant 0 : i32
    %c0_i32_0 = arith.constant 0 : i32
    return %arg0, %c0_i32 : i32, i32
  }
  func.func @transform_8(%arg0: i32) -> (i32, i32) {
    %c0_i32 = arith.constant 0 : i32
    %c0_i32_0 = arith.constant 0 : i32
    return %arg0, %c0_i32 : i32, i32
  }
}

</mosaic_0001>

<llo_original>
// kernel: tpu_custom_call.1
$region0: #{tpu_custom_call.1}
  #allocation0 [shape = 'u32[]', space=smem, size = 0x4, offset = 0x4, fixed_abs, tag = 'smem constant byte address 0x4 - core index']
  #allocation1 [shape = 'u32[144,128]{1,0:T(1,128)}', space=vmem, size = 0x12000, scoped, tag = 'internal scratch']
  %s0 = inlined_call_operand.hbm [shape: f32[8,16], index: 0, kind: input, shape index: {}]
  %s1 = inlined_call_operand.vmem [shape: f32[16,32], index: 1, kind: input, shape index: {}]
  %s2 = inlined_call_operand.vmem [shape: f32[1,32], index: 2, kind: input, shape index: {}]
  %s3 = inlined_call_operand.vmem [shape: f32[32,32], index: 3, kind: input, shape index: {}]
  %s4 = inlined_call_operand.vmem [shape: f32[1,32], index: 4, kind: input, shape index: {}]
  %s5 = inlined_call_operand.vmem [shape: f32[32,16], index: 5, kind: input, shape index: {}]
  %s6 = inlined_call_operand.vmem [shape: f32[1,16], index: 6, kind: input, shape index: {}]
  %s7 = inlined_call_operand.hbm [shape: f32[8,16], index: 7, kind: output, shape index: {0}]
  %s8 = inlined_call_operand.hbm [shape: f32[8,32], index: 8, kind: output, shape index: {1}]
  %9 = xla_tuple %s7, %s8
  %s10 = sld [smem:[#allocation0]]
  $region50: #{tpu_custom_call.1} parent=0
    _
  %s12 = ssub.s32 1, %s10
  %s13 = scalar_select 0, %s12, %s10
  $region1: #{tpu_custom_call.1} parent=0
    #allocation2 [shape = 'u8[4096]{0}', space=vmem, size = 0x1000, scoped, tag = 'input window, operand 0, single buffered']
    #allocation3 [shape = 's32[1]{0}', space=sflag, size = 0x4, scoped, tag = 'scoped memory for tpu_custom_call.1']
    #allocation4 [shape = 's32[1]{0}', space=sflag, size = 0x4, scoped, tag = 'scoped memory for tpu_custom_call.1']
    #allocation5 [shape = 'u8[4096]{0}', space=vmem, size = 0x1000, scoped, tag = 'output window, operand 0, single buffered']
    #allocation6 [shape = 'u8[4096]{0}', space=vmem, size = 0x1000, scoped, tag = 'output window, operand 1, single buffered']
    #allocation7 [shape = 's32[1]{0}', space=sflag, size = 0x4, scoped, tag = 'scoped memory for tpu_custom_call.1']
    %14 = vsyncpa [#allocation3], 0
    %15 = vsyncpa [#allocation4], 0
    %16 = vsyncpa [#allocation7], 0
    // Predicated region
    $region2: #{tpu_custom_call.1} parent=1 // pred_check
      _
    $region3: #{tpu_custom_call.1} parent=1 // pred_check_branch
      %18 = sbr.rel (0) target = $region5
    $region4: #{tpu_custom_call.1} parent=1 // pred_region
      %s20 = ssub.s32 128, 128
      %21 = vsyncadd [#allocation3], %s20
      %s23 = sshll.u32 [#allocation2], 4
      %s24 = int_to_ptr.vmem [resolvable:$true] %s23
      %26 = dma.hbm_to_vmem [thread:$0]  %s0, 128, %s24, [#allocation3]
    $region5: #{tpu_custom_call.1} parent=1 // pred_fallthru
      _
    // Predicated region
    $region6: #{tpu_custom_call.1} parent=1 // pred_check
      _
    $region7: #{tpu_custom_call.1} parent=1 // pred_check_branch
      %28 = sbr.rel (0) target = $region9
    $region8: #{tpu_custom_call.1} parent=1 // pred_region
      _
    $region9: #{tpu_custom_call.1} parent=1 // pred_fallthru
      _
    // Predicated region
    $region10: #{tpu_custom_call.1} parent=1 // pred_check
      _
    $region11: #{tpu_custom_call.1} parent=1 // pred_check_branch
      %30 = sbr.rel (0) target = $region13
    $region12: #{tpu_custom_call.1} parent=1 // pred_region
      _
    $region13: #{tpu_custom_call.1} parent=1 // pred_fallthru
      _
    // Predicated region
    $region14: #{tpu_custom_call.1} parent=1 // pred_check
      _
    $region15: #{tpu_custom_call.1} parent=1 // pred_check_branch
      %32 = sbr.rel (0) target = $region17
    $region16: #{tpu_custom_call.1} parent=1 // pred_region
      _
    $region17: #{tpu_custom_call.1} parent=1 // pred_fallthru
      _
    // Predicated region
    $region18: #{tpu_custom_call.1} parent=1 // pred_check
      _
    $region19: #{tpu_custom_call.1} parent=1 // pred_check_branch
      %34 = sbr.rel (0) target = $region21
    $region20: #{tpu_custom_call.1} parent=1 // pred_region
      _
    $region21: #{tpu_custom_call.1} parent=1 // pred_fallthru
      _
    // Predicated region
    $region22: #{tpu_custom_call.1} parent=1 // pred_check
      _
    $region23: #{tpu_custom_call.1} parent=1 // pred_check_branch
      %36 = sbr.rel (0) target = $region25
    $region24: #{tpu_custom_call.1} parent=1 // pred_region
      _
    $region25: #{tpu_custom_call.1} parent=1 // pred_fallthru
      _
    // Predicated region
    $region26: #{tpu_custom_call.1} parent=1 // pred_check
      _
    $region27: #{tpu_custom_call.1} parent=1 // pred_check_branch
      %38 = sbr.rel (0) target = $region29
    $region28: #{tpu_custom_call.1} parent=1 // pred_region
      _
    $region29: #{tpu_custom_call.1} parent=1 // pred_fallthru
      _
    // Predicated region
    $region30: #{tpu_custom_call.1} parent=1 // pred_check
      _
    $region31: #{tpu_custom_call.1} parent=1 // pred_check_branch
      %40 = sbr.rel (0) target = $region33
    $region32: #{tpu_custom_call.1} parent=1 // pred_region
      %41 = dma.done [#allocation3], 128
    $region33: #{tpu_custom_call.1} parent=1 // pred_fallthru
      _
    %v42 = vld [vmem:[#allocation2] sm:$0xff]
    %v43 = vld [vmem:[%s1] sm:$0xff]
    %v44 = vld [vmem:[%s1 + $0x8] sm:$0xff]
    %v45 = vld [vmem:[%s2] sm:$0x1]
    %v47 = vlaneseq
    %v48 = vshrl.u32 %v47, 7
    %v49 = vsub.s32 0, %v48
    %v50 = vrot.slane %v45, %v49
    %vm52 = vcmask 130048
    %v54 = vsel %vm52, %v42, 0
    %56 = vmatprep.subr.mxu0 0.0
    %57 = vmatpush1.msra.mxu0 0.0
    %58 = vmatprep.subr.mxu0 0.0
    %59 = vmatpush1.msra.mxu0 0.0
    %60 = vmatprep.subr.mxu0 0.0
    %61 = vmatpush1.msra.mxu0 0.0
    %62 = vmatprep.subr.mxu0 0.0
    %63 = vmatpush1.msra.mxu0 0.0
    %64 = vmatprep.subr.mxu0 0.0
    %65 = vmatpush1.msra.mxu0 0.0
    %66 = vmatprep.subr.mxu0 0.0
    %67 = vmatpush1.msra.mxu0 0.0
    %68 = vmatprep.subr.mxu0 0.0
    %69 = vmatpush1.msra.mxu0 0.0
    %70 = vmatprep.subr.mxu0 0.0
    %71 = vmatpush1.msra.mxu0 0.0
    %72 = vmatprep.subr.mxu0 0.0
    %73 = vmatpush1.msra.mxu0 0.0
    %74 = vmatprep.subr.mxu0 0.0
    %75 = vmatpush1.msra.mxu0 0.0
    %76 = vmatprep.subr.mxu0 0.0
    %77 = vmatpush1.msra.mxu0 0.0
    %78 = vmatprep.subr.mxu0 0.0
    %79 = vmatpush1.msra.mxu0 0.0
    %80 = vmatprep.subr.mxu0 0.0
    %81 = vmatpush1.msra.mxu0 0.0
    %82 = vmatprep.subr.mxu0 0.0
    %83 = vmatpush1.msra.mxu0 0.0
    %84 = vmatprep.subr.mxu0 0.0
    %85 = vmatpush1.msra.mxu0 %v44
    %86 = vmatprep.subr.mxu0 0.0
    %87 = vmatpush1.msra.mxu0 %v43
    %88 = vmatprep.subr.mxu0 0.0
    %89 = vmatpush2.msra.mxu0 0.0
    %90 = vmatprep.subr.mxu0 0.0
    %91 = vmatpush2.msra.mxu0 0.0
    %92 = vmatprep.subr.mxu0 0.0
    %93 = vmatpush2.msra.mxu0 0.0
    %94 = vmatprep.subr.mxu0 0.0
    %95 = vmatpush2.msra.mxu0 0.0
    %96 = vmatprep.subr.mxu0 0.0
    %97 = vmatpush2.msra.mxu0 0.0
    %98 = vmatprep.subr.mxu0 0.0
    %99 = vmatpush2.msra.mxu0 0.0
    %100 = vmatprep.subr.mxu0 0.0
    %101 = vmatpush2.msra.mxu0 0.0
    %102 = vmatprep.subr.mxu0 0.0
    %103 = vmatpush2.msra.mxu0 0.0
    %104 = vmatprep.subr.mxu0 0.0
    %105 = vmatpush2.msra.mxu0 0.0
    %106 = vmatprep.subr.mxu0 0.0
    %107 = vmatpush2.msra.mxu0 0.0
    %108 = vmatprep.subr.mxu0 0.0
    %109 = vmatpush2.msra.mxu0 0.0
    %110 = vmatprep.subr.mxu0 0.0
    %111 = vmatpush2.msra.mxu0 0.0
    %112 = vmatprep.subr.mxu0 0.0
    %113 = vmatpush2.msra.mxu0 0.0
    %114 = vmatprep.subr.mxu0 0.0
    %115 = vmatpush2.msra.mxu0 0.0
    %116 = vmatprep.subr.mxu0 0.0
    %117 = vmatpush2.msra.mxu0 0.0
    %118 = vmatprep.subr.mxu0 0.0
    %119 = vmatpush2.msra.mxu0 0.0
    %120 = vmatprep.mubr.f32.mxu0 0.0
    %121 = vmatmul.mubr.f32.gmra.mxu0 %v54
    %v122 = vpop.f32.mrf.mxu0
    %v123 = vadd.f32 %v50, %v122
    %v124 = vpop.f32.mrf.mxu0
    %125 = vdwg.mxu0
    %v126 = vmax.f32 %v123, 0.0
    %v127 = vld [vmem:[%s3] sm:$0xff]
    %v128 = vld [vmem:[%s3 + $0x8] sm:$0xff]
    %v129 = vld [vmem:[%s3 + $0x10] sm:$0xff]
    %v130 = vld [vmem:[%s3 + $0x18] sm:$0xff]
    %v131 = vld [vmem:[%s4] sm:$0x1]
    %v133 = vlaneseq
    %v134 = vshrl.u32 %v133, 7
    %v135 = vsub.s32 0, %v134
    %v136 = vrot.slane %v131, %v135
    %vm138 = vcmask 261120
    %v140 = vsel %vm138, %v126, 0
    %142 = vmatprep.subr.mxu0 0.0
    %143 = vmatpush1.msra.mxu0 0.0
    %144 = vmatprep.subr.mxu0 0.0
    %145 = vmatpush1.msra.mxu0 0.0
    %146 = vmatprep.subr.mxu0 0.0
    %147 = vmatpush1.msra.mxu0 0.0
    %148 = vmatprep.subr.mxu0 0.0
    %149 = vmatpush1.msra.mxu0 0.0
    %150 = vmatprep.subr.mxu0 0.0
    %151 = vmatpush1.msra.mxu0 0.0
    %152 = vmatprep.subr.mxu0 0.0
    %153 = vmatpush1.msra.mxu0 0.0
    %154 = vmatprep.subr.mxu0 0.0
    %155 = vmatpush1.msra.mxu0 0.0
    %156 = vmatprep.subr.mxu0 0.0
    %157 = vmatpush1.msra.mxu0 0.0
    %158 = vmatprep.subr.mxu0 0.0
    %159 = vmatpush1.msra.mxu0 0.0
    %160 = vmatprep.subr.mxu0 0.0
    %161 = vmatpush1.msra.mxu0 0.0
    %162 = vmatprep.subr.mxu0 0.0
    %163 = vmatpush1.msra.mxu0 0.0
    %164 = vmatprep.subr.mxu0 0.0
    %165 = vmatpush1.msra.mxu0 0.0
    %166 = vmatprep.subr.mxu0 0.0
    %167 = vmatpush1.msra.mxu0 %v130
    %168 = vmatprep.subr.mxu0 0.0
    %169 = vmatpush1.msra.mxu0 %v129
    %170 = vmatprep.subr.mxu0 0.0
    %171 = vmatpush1.msra.mxu0 %v128
    %172 = vmatprep.subr.mxu0 0.0
    %173 = vmatpush1.msra.mxu0 %v127
    %174 = vmatprep.subr.mxu0 0.0
    %175 = vmatpush2.msra.mxu0 0.0
    %176 = vmatprep.subr.mxu0 0.0
    %177 = vmatpush2.msra.mxu0 0.0
    %178 = vmatprep.subr.mxu0 0.0
    %179 = vmatpush2.msra.mxu0 0.0
    %180 = vmatprep.subr.mxu0 0.0
    %181 = vmatpush2.msra.mxu0 0.0
    %182 = vmatprep.subr.mxu0 0.0
    %183 = vmatpush2.msra.mxu0 0.0
    %184 = vmatprep.subr.mxu0 0.0
    %185 = vmatpush2.msra.mxu0 0.0
    %186 = vmatprep.subr.mxu0 0.0
    %187 = vmatpush2.msra.mxu0 0.0
    %188 = vmatprep.subr.mxu0 0.0
    %189 = vmatpush2.msra.mxu0 0.0
    %190 = vmatprep.subr.mxu0 0.0
    %191 = vmatpush2.msra.mxu0 0.0
    %192 = vmatprep.subr.mxu0 0.0
    %193 = vmatpush2.msra.mxu0 0.0
    %194 = vmatprep.subr.mxu0 0.0
    %195 = vmatpush2.msra.mxu0 0.0
    %196 = vmatprep.subr.mxu0 0.0
    %197 = vmatpush2.msra.mxu0 0.0
    %198 = vmatprep.subr.mxu0 0.0
    %199 = vmatpush2.msra.mxu0 0.0
    %200 = vmatprep.subr.mxu0 0.0
    %201 = vmatpush2.msra.mxu0 0.0
    %202 = vmatprep.subr.mxu0 0.0
    %203 = vmatpush2.msra.mxu0 0.0
    %204 = vmatprep.subr.mxu0 0.0
    %205 = vmatpush2.msra.mxu0 0.0
    %206 = vmatprep.mubr.f32.mxu0 0.0
    %207 = vmatmul.mubr.f32.gmra.mxu0 %v140
    %v208 = vpop.f32.mrf.mxu0
    %v209 = vadd.f32 %v136, %v208
    %v210 = vpop.f32.mrf.mxu0
    %211 = vdwg.mxu0
    %v212 = vmax.f32 %v209, 0.0
    %v213 = vld [vmem:[%s5] sm:$0xff]
    %v214 = vld [vmem:[%s5 + $0x8] sm:$0xff]
    %v215 = vld [vmem:[%s5 + $0x10] sm:$0xff]
    %v216 = vld [vmem:[%s5 + $0x18] sm:$0xff]
    %v217 = vld [vmem:[%s6] sm:$0x1]
    %v219 = vlaneseq
    %v220 = vshrl.u32 %v219, 7
    %v221 = vsub.s32 0, %v220
    %v222 = vrot.slane %v217, %v221
    %v225 = vsel %vm138, %v212, 0
    %227 = vmatprep.subr.mxu0 0.0
    %228 = vmatpush1.msra.mxu0 0.0
    %229 = vmatprep.subr.mxu0 0.0
    %230 = vmatpush1.msra.mxu0 0.0
    %231 = vmatprep.subr.mxu0 0.0
    %232 = vmatpush1.msra.mxu0 0.0
    %233 = vmatprep.subr.mxu0 0.0
    %234 = vmatpush1.msra.mxu0 0.0
    %235 = vmatprep.subr.mxu0 0.0
    %236 = vmatpush1.msra.mxu0 0.0
    %237 = vmatprep.subr.mxu0 0.0
    %238 = vmatpush1.msra.mxu0 0.0
    %239 = vmatprep.subr.mxu0 0.0
    %240 = vmatpush1.msra.mxu0 0.0
    %241 = vmatprep.subr.mxu0 0.0
    %242 = vmatpush1.msra.mxu0 0.0
    %243 = vmatprep.subr.mxu0 0.0
    %244 = vmatpush1.msra.mxu0 0.0
    %245 = vmatprep.subr.mxu0 0.0
    %246 = vmatpush1.msra.mxu0 0.0
    %247 = vmatprep.subr.mxu0 0.0
    %248 = vmatpush1.msra.mxu0 0.0
    %249 = vmatprep.subr.mxu0 0.0
    %250 = vmatpush1.msra.mxu0 0.0
    %251 = vmatprep.subr.mxu0 0.0
    %252 = vmatpush1.msra.mxu0 %v216
    %253 = vmatprep.subr.mxu0 0.0
    %254 = vmatpush1.msra.mxu0 %v215
    %255 = vmatprep.subr.mxu0 0.0
    %256 = vmatpush1.msra.mxu0 %v214
    %257 = vmatprep.subr.mxu0 0.0
    %258 = vmatpush1.msra.mxu0 %v213
    %259 = vmatprep.subr.mxu0 0.0
    %260 = vmatpush2.msra.mxu0 0.0
    %261 = vmatprep.subr.mxu0 0.0
    %262 = vmatpush2.msra.mxu0 0.0
    %263 = vmatprep.subr.mxu0 0.0
    %264 = vmatpush2.msra.mxu0 0.0
    %265 = vmatprep.subr.mxu0 0.0
    %266 = vmatpush2.msra.mxu0 0.0
    %267 = vmatprep.subr.mxu0 0.0
    %268 = vmatpush2.msra.mxu0 0.0
    %269 = vmatprep.subr.mxu0 0.0
    %270 = vmatpush2.msra.mxu0 0.0
    %271 = vmatprep.subr.mxu0 0.0
    %272 = vmatpush2.msra.mxu0 0.0
    %273 = vmatprep.subr.mxu0 0.0
    %274 = vmatpush2.msra.mxu0 0.0
    %275 = vmatprep.subr.mxu0 0.0
    %276 = vmatpush2.msra.mxu0 0.0
    %277 = vmatprep.subr.mxu0 0.0
    %278 = vmatpush2.msra.mxu0 0.0
    %279 = vmatprep.subr.mxu0 0.0
    %280 = vmatpush2.msra.mxu0 0.0
    %281 = vmatprep.subr.mxu0 0.0
    %282 = vmatpush2.msra.mxu0 0.0
    %283 = vmatprep.subr.mxu0 0.0
    %284 = vmatpush2.msra.mxu0 0.0
    %285 = vmatprep.subr.mxu0 0.0
    %286 = vmatpush2.msra.mxu0 0.0
    %287 = vmatprep.subr.mxu0 0.0
    %288 = vmatpush2.msra.mxu0 0.0
    %289 = vmatprep.subr.mxu0 0.0
    %290 = vmatpush2.msra.mxu0 0.0
    %291 = vmatprep.mubr.f32.mxu0 0.0
    %292 = vmatmul.mubr.f32.gmra.mxu0 %v225
    %v293 = vpop.f32.mrf.mxu0
    %v294 = vadd.f32 %v222, %v293
    %v295 = vpop.f32.mrf.mxu0
    %296 = vdwg.mxu0
    %297 = vst.msk [vmem:[#allocation5] sm:$0xff] %vm52, %v294
    %298 = vst.msk [vmem:[#allocation6] sm:$0xff] %vm138, %v212
    // Predicated region
    $region34: #{tpu_custom_call.1} parent=1 // pred_check
      _
    $region35: #{tpu_custom_call.1} parent=1 // pred_check_branch
      %300 = sbr.rel (0) target = $region37
    $region36: #{tpu_custom_call.1} parent=1 // pred_region
      %s302 = ssub.s32 128, 128
      %303 = vsyncadd [#allocation4], %s302
      %s305 = sshll.u32 [#allocation5], 4
      %s306 = int_to_ptr.vmem [resolvable:$true] %s305
      %308 = dma.vmem_to_hbm [thread:$0]  %s306, 128, %s7, [#allocation4]
    $region37: #{tpu_custom_call.1} parent=1 // pred_fallthru
      _
    // Predicated region
    $region38: #{tpu_custom_call.1} parent=1 // pred_check
      _
    $region39: #{tpu_custom_call.1} parent=1 // pred_check_branch
      %310 = sbr.rel (0) target = $region41
    $region40: #{tpu_custom_call.1} parent=1 // pred_region
      %s312 = ssub.s32 128, 128
      %313 = vsyncadd [#allocation7], %s312
      %s315 = sshll.u32 [#allocation6], 4
      %s316 = int_to_ptr.vmem [resolvable:$true] %s315
      %318 = dma.vmem_to_hbm [thread:$0]  %s316, 128, %s8, [#allocation7]
    $region41: #{tpu_custom_call.1} parent=1 // pred_fallthru
      _
    // Predicated region
    $region42: #{tpu_custom_call.1} parent=1 // pred_check
      _
    $region43: #{tpu_custom_call.1} parent=1 // pred_check_branch
      %320 = sbr.rel (0) target = $region45
    $region44: #{tpu_custom_call.1} parent=1 // pred_region
      %321 = dma.done [#allocation4], 128
    $region45: #{tpu_custom_call.1} parent=1 // pred_fallthru
      _
    // Predicated region
    $region46: #{tpu_custom_call.1} parent=1 // pred_check
      _
    $region47: #{tpu_custom_call.1} parent=1 // pred_check_branch
      %323 = sbr.rel (0) target = $region49
    $region48: #{tpu_custom_call.1} parent=1 // pred_region
      %324 = dma.done [#allocation7], 128
    $region49: #{tpu_custom_call.1} parent=1 // pred_fallthru
      _
    %325 = vsyncpa [#allocation3], 1
    %326 = vsyncpa [#allocation4], 1
    %327 = vsyncpa [#allocation7], 1

</llo_original>
